<compile_context>
chip_gen: v5e
topology: v5e:2x2
jax: 0.10.0
libtpu: 0.0.40
codegen_flags: <defaults>
</compile_context>

<pallas_src>
import functools

import jax
import jax.numpy as jnp
from jax.experimental import pallas as pl
from jax.experimental.pallas import tpu as pltpu


def _round_up(n: int, m: int) -> int:
    return ((n + m - 1) // m) * m


# ----------------------------------------------------------------------------
# Kernel
# ----------------------------------------------------------------------------
def _mlp_kernel(x_ref, w1_ref, b1_ref, w2_ref, b2_ref, w3_ref, b3_ref, o_ref,
                *, apply_softmax: bool):
    """Fused forward for one (TB, in) row block.

    x arrives fp32 (native HBM stream) and is cast to the weights' compute
    dtype on the VPU.  All matmuls accumulate in fp32; elementwise math fp32.
    """
    cd = w1_ref.dtype

    b1 = b1_ref[...]                                    # fp32, grid-invariant
    b2 = b2_ref[...]
    b3 = b3_ref[...]

    x = x_ref[...].astype(cd)                           # VPU cast (free slot)

    # Layer 1
    h1 = jnp.dot(x, w1_ref[...], preferred_element_type=jnp.float32) + b1
    h1 = jnp.maximum(h1, 0.0).astype(cd)                # ReLU, back to MXU dtype

    # Layer 2 (hidden dim zero-padded to 128 lanes; exact through ReLU)
    h2 = jnp.dot(h1, w2_ref[...], preferred_element_type=jnp.float32) + b2
    h2 = jnp.maximum(h2, 0.0).astype(cd)

    # Layer 3 (classifier, lane-padded to 128).  Padded W3 columns are zero and
    # padded b3 entries are -1e30 (fp32), so padded logits are ~-1e30.
    logits = jnp.dot(h2, w3_ref[...], preferred_element_type=jnp.float32) + b3

    if apply_softmax:
        # nn.Softmax(dim=1), numerically stabilized; exp(-1e30 - m) == 0 so the
        # padded lanes contribute exactly 0 to the denominator.
        m = jnp.max(logits, axis=1, keepdims=True)
        e = jnp.exp(logits - m)
        denom = jnp.sum(e, axis=1, keepdims=True)
        out = e * pl.reciprocal(denom, approx=True)     # EUP vrcp
    else:
        out = logits                                    # training / binary: raw logits

    # Narrow (masked) store of only the useful classifier lanes, or full padded
    # block if the output was requested lane-dense.
    o_ref[...] = out[:, :o_ref.shape[-1]].astype(o_ref.dtype)


# ----------------------------------------------------------------------------
# One-time parameter preparation (hoisted out of the forward path)
# ----------------------------------------------------------------------------
def prepare_params(params, num_classes: int, *, compute_dtype=jnp.bfloat16,
                   training: bool = False):
    """Pad + cast weights once.  Returns a dict consumed by cnn_classifier_forward."""
    apply_softmax = (not training) and num_classes > 2
    cd = jnp.dtype(compute_dtype)

    c_pad = max(128, _round_up(num_classes, 128))       # lane-dense classifier dim
    h2p = 128                                           # hidden-64 -> 128 lanes

    w1 = params["w1"].astype(cd)
    b1 = params["b1"].astype(jnp.float32)

    w2 = jnp.pad(params["w2"], ((0, 0), (0, h2p - 64))).astype(cd)
    b2 = jnp.pad(params["b2"], ((0, 0), (0, h2p - 64))).astype(jnp.float32)

    # Pad BEFORE casting; b3 stays fp32 so the -1e30 pad trick is exact.
    w3 = jnp.pad(params["w3"],
                 ((0, h2p - 64), (0, c_pad - num_classes))).astype(cd)
    b3 = params["b3"].astype(jnp.float32)
    if c_pad > num_classes:
        fill = -1e30 if apply_softmax else 0.0
        b3 = jnp.pad(b3, ((0, 0), (0, c_pad - num_classes)), constant_values=fill)

    return {
        "w1": w1, "b1": b1, "w2": w2, "b2": b2, "w3": w3, "b3": b3,
        "num_classes": num_classes, "c_pad": c_pad, "h2p": h2p,
        "apply_softmax": apply_softmax, "compute_dtype": cd,
    }


# ----------------------------------------------------------------------------
# VMEM budgeting
# ----------------------------------------------------------------------------
def _vmem_capacity_bytes() -> int:
    try:
        return int(pltpu.get_tpu_info().vmem_capacity_bytes)
    except Exception:
        return 64 * 2**20          # conservative: v7x per-TC VMEM


def _vmem_estimate(tb, input_size, c_pad, c_out, cd_bytes, out_bytes):
    """Rough working-set (bytes) for one grid step.  Includes double buffers."""
    x_stream = 2 * tb * input_size * 4                  # fp32 x, double-buffered
    out_stream = 2 * tb * c_out * out_bytes             # output, double-buffered
    weights = 2 * ((input_size * 128 + 128 * 128 + 128 * c_pad) * cd_bytes
                   + (128 + 128 + c_pad) * 4)           # default double-buffered
    inter = tb * (input_size * cd_bytes                 # cast x
                  + 2 * 128 * (4 + cd_bytes)            # h1/h2 fp32 + cast copies
                  + 2 * c_pad * 4)                      # logits / softmax temps
    return x_stream + out_stream + weights + inter


# ----------------------------------------------------------------------------
# Forward wrapper
# ----------------------------------------------------------------------------
def cnn_classifier_forward(x, prep, *, out_dtype=None, block_batch: int | None = None,
                           lane_dense_output: bool = False):
    """Pallas-backed forward pass of CNNClassifier.

    x:    (batch, input_size) float32 (streamed as-is; cast happens in-kernel)
    prep: output of prepare_params()
    """
    batch, input_size = x.shape
    cd = prep["compute_dtype"]
    num_classes = prep["num_classes"]
    c_pad = prep["c_pad"]
    h2p = prep["h2p"]
    apply_softmax = prep["apply_softmax"]
    assert prep["w1"].shape[0] == input_size

    out_dtype = jnp.dtype(out_dtype) if out_dtype is not None else cd
    cd_bytes = cd.itemsize
    out_bytes = out_dtype.itemsize
    c_out = c_pad if lane_dense_output else num_classes

    # ---- generation-aware VMEM budget ---------------------------------------
    capacity = _vmem_capacity_bytes()                   # 128 MiB v5e/v6e, 64 MiB v7x
    budget = capacity - max(16 * 2**20, capacity // 4)  # leave compiler headroom

    # ---- batch tile ----------------------------------------------------------
    # bf16 packs two rows per sublane -> align tb to 16 (32 for 8-bit dtypes).
    align = 8 if cd_bytes >= 4 else (16 if cd_bytes == 2 else 32)
    if block_batch is not None:
        tb = max(align, (block_batch // align) * align)
    else:
        tb = min(4096, _round_up(batch, align))
        tb = max(align, (tb // align) * align)
        while (tb > align and
               _vmem_estimate(tb, input_size, c_pad, c_out, cd_bytes, out_bytes) > budget):
            tb = max(align, ((tb // 2) // align) * align)
        # Keep >= 4 grid steps when batch permits (v7x megacore + pipelining).
        min_steps = 4
        if batch >= min_steps * align:
            cap = max(align, (((batch + min_steps - 1) // min_steps) // align) * align)
            tb = min(tb, cap)
    grid = (pl.cdiv(batch, tb),)

    est = _vmem_estimate(tb, input_size, c_pad, c_out, cd_bytes, out_bytes)
    vmem_limit = int(min(capacity - (4 << 20), max(32 << 20, est + (4 << 20))))

    def resident(shape):
        # Same block index every grid step -> stays VMEM-resident, no re-DMA.
        return pl.BlockSpec(shape, lambda i: (0, 0))

    kernel = functools.partial(_mlp_kernel, apply_softmax=apply_softmax)

    out = pl.pallas_call(
        kernel,
        out_shape=jax.ShapeDtypeStruct((batch, c_out), out_dtype),
        grid=grid,
        in_specs=[
            pl.BlockSpec((tb, input_size), lambda i: (i, 0)),   # streamed fp32 x rows
            resident((input_size, 128)),                        # w1
            resident((1, 128)),                                 # b1
            resident((128, h2p)),                               # w2 (hidden padded)
            resident((1, h2p)),                                 # b2
            resident((h2p, c_pad)),                             # w3 (lane-padded)
            resident((1, c_pad)),                               # b3 (lane-padded, fp32)
        ],
        out_specs=pl.BlockSpec((tb, c_out), lambda i: (i, 0)),
        compiler_params=pltpu.CompilerParams(
            dimension_semantics=("parallel",),                  # v7x: shard batch over TCs
            vmem_limit_bytes=vmem_limit,
        ),
    )(x, prep["w1"], prep["b1"], prep["w2"], prep["b2"], prep["w3"], prep["b3"])

    if lane_dense_output and c_out > num_classes:
        out = out[:, :num_classes]
    return out


# ----------------------------------------------------------------------------
# Reference + init
# ----------------------------------------------------------------------------
def init_params(key, input_size: int, num_classes: int):
    """Deterministic synthetic init (PyTorch-Linear-like uniform ranges)."""
    ks = jax.random.split(key, 6)

    def lin(kw, kb, fan_in, fan_out):
        bound = 1.0 / jnp.sqrt(fan_in)
        w = jax.random.uniform(kw, (fan_in, fan_out), jnp.float32, -bound, bound)
        b = jax.random.uniform(kb, (1, fan_out), jnp.float32, -bound, bound)
        return w, b

    w1, b1 = lin(ks[0], ks[1], input_size, 128)
    w2, b2 = lin(ks[2], ks[3], 128, 64)
    w3, b3 = lin(ks[4], ks[5], 64, num_classes)
    return {"w1": w1, "b1": b1, "w2": w2, "b2": b2, "w3": w3, "b3": b3}


def _reference_forward(x, p, num_classes, training=False):
    h1 = jnp.maximum(x @ p["w1"] + p["b1"], 0.0)
    h2 = jnp.maximum(h1 @ p["w2"] + p["b2"], 0.0)
    logits = h2 @ p["w3"] + p["b3"]
    if (not training) and num_classes > 2:
        return jax.nn.softmax(logits, axis=1)
    return logits


if __name__ == "__main__":
    key = jax.random.PRNGKey(0)
    kx, kp = jax.random.split(key)

    batch = 8
    input_size = 32
    num_classes = 4          # multi-class -> eval mode applies Softmax(dim=1)

    x = jax.random.normal(kx, (batch, input_size), jnp.float32)
    params = init_params(kp, input_size, num_classes)
    ref = _reference_forward(x, params, num_classes, training=False)
    ref_tr = _reference_forward(x, params, num_classes, training=True)

    # fp32 compute, fp32 narrow output (accuracy path).
    prep32 = prepare_params(params, num_classes, compute_dtype=jnp.float32,
                            training=False)
    out_f32 = jax.block_until_ready(
        cnn_classifier_forward(x, prep32, out_dtype=jnp.float32))
    assert out_f32.shape == (batch, num_classes)
    assert jnp.allclose(out_f32, ref, atol=2e-2, rtol=5e-2), "fp32 mismatch vs reference"

    # bf16 compute, bf16 narrow output (perf config for v5e/v6e/v7x).
    prep16 = prepare_params(params, num_classes, compute_dtype=jnp.bfloat16,
                            training=False)
    out_bf16 = jax.block_until_ready(cnn_classifier_forward(x, prep16))
    assert out_bf16.shape == (batch, num_classes)
    assert jnp.allclose(out_bf16.astype(jnp.float32), ref,
                        atol=3e-2, rtol=5e-2), "bf16 mismatch vs reference"

    # training mode returns raw logits (no softmax).
    prep_tr = prepare_params(params, num_classes, compute_dtype=jnp.float32,
                             training=True)
    out_tr = jax.block_until_ready(
        cnn_classifier_forward(x, prep_tr, out_dtype=jnp.float32))
    assert jnp.allclose(out_tr, ref_tr, atol=3e-2, rtol=3e-2), "logits mismatch vs reference"

    # Optional lane-dense (128-wide padded) output path still matches.
    out_ld = jax.block_until_ready(
        cnn_classifier_forward(x, prep32, out_dtype=jnp.float32,
                               lane_dense_output=True))
    assert out_ld.shape == (batch, num_classes)
    assert jnp.allclose(out_ld, ref, atol=2e-2, rtol=5e-2), "padded-output mismatch vs reference"

    print("KERNEL_OK")
</pallas_src>

<mosaic_0001>
module attributes {stable_mosaic.version = 11 : i64} {
  func.func @_mlp_kernel(%arg0: i32, %arg1: memref<8x32xf32, #tpu.memory_space<vmem>>, %arg2: memref<32x128xf32, #tpu.memory_space<vmem>>, %arg3: memref<1x128xf32, #tpu.memory_space<vmem>>, %arg4: memref<128x128xf32, #tpu.memory_space<vmem>>, %arg5: memref<1x128xf32, #tpu.memory_space<vmem>>, %arg6: memref<128x128xf32, #tpu.memory_space<vmem>>, %arg7: memref<1x128xf32, #tpu.memory_space<vmem>>, %arg8: memref<8x4xf32, #tpu.memory_space<vmem>>) attributes {dimension_semantics = [#tpu.dimension_semantics<parallel>], iteration_bounds = array<i64: 1>, scalar_prefetch = 0 : i64, scratch_operands = 0 : i64, tpu.core_type = #tpu.core_type<tc>, window_params = [{transform_indices = @transform_0, window_bounds = array<i64: 8, 32>}, {pipeline_mode = #tpu.pipeline_mode<synchronous>, transform_indices = @transform_1, window_bounds = array<i64: 32, 128>}, {pipeline_mode = #tpu.pipeline_mode<synchronous>, transform_indices = @transform_2, window_bounds = array<i64: 1, 128>}, {pipeline_mode = #tpu.pipeline_mode<synchronous>, transform_indices = @transform_3, window_bounds = array<i64: 128, 128>}, {pipeline_mode = #tpu.pipeline_mode<synchronous>, transform_indices = @transform_4, window_bounds = array<i64: 1, 128>}, {pipeline_mode = #tpu.pipeline_mode<synchronous>, transform_indices = @transform_5, window_bounds = array<i64: 128, 128>}, {pipeline_mode = #tpu.pipeline_mode<synchronous>, transform_indices = @transform_6, window_bounds = array<i64: 1, 128>}, {transform_indices = @transform_7, window_bounds = array<i64: 8, 4>}]} {
    %c0 = arith.constant 0 : index
    %c0_0 = arith.constant 0 : index
    %0 = vector.load %arg3[%c0, %c0_0] : memref<1x128xf32, #tpu.memory_space<vmem>>, vector<1x128xf32>
    %c0_1 = arith.constant 0 : index
    %c0_2 = arith.constant 0 : index
    %1 = vector.load %arg5[%c0_1, %c0_2] : memref<1x128xf32, #tpu.memory_space<vmem>>, vector<1x128xf32>
    %c0_3 = arith.constant 0 : index
    %c0_4 = arith.constant 0 : index
    %2 = vector.load %arg7[%c0_3, %c0_4] : memref<1x128xf32, #tpu.memory_space<vmem>>, vector<1x128xf32>
    %c0_5 = arith.constant 0 : index
    %c0_6 = arith.constant 0 : index
    %3 = vector.load %arg1[%c0_5, %c0_6] : memref<8x32xf32, #tpu.memory_space<vmem>>, vector<8x32xf32>
    %c0_7 = arith.constant 0 : index
    %c0_8 = arith.constant 0 : index
    %4 = vector.load %arg2[%c0_7, %c0_8] : memref<32x128xf32, #tpu.memory_space<vmem>>, vector<32x128xf32>
    %cst = arith.constant dense<0.000000e+00> : vector<8x128xf32>
    %5 = tpu.matmul %3, %4, %cst {dimension_numbers = #tpu.dot_dimension_numbers<[1], [0], [0], [1], [0, 0, 1, 1], [], []>} : vector<8x32xf32>, vector<32x128xf32>, vector<8x128xf32> -> vector<8x128xf32>
    %6 = vector.broadcast %0 : vector<1x128xf32> to vector<8x128xf32>
    %7 = arith.addf %5, %6 : vector<8x128xf32>
    %cst_9 = arith.constant 0.000000e+00 : f32
    %8 = vector.broadcast %cst_9 : f32 to vector<8x128xf32>
    %9 = arith.maximumf %7, %8 : vector<8x128xf32>
    %c0_10 = arith.constant 0 : index
    %c0_11 = arith.constant 0 : index
    %10 = vector.load %arg4[%c0_10, %c0_11] : memref<128x128xf32, #tpu.memory_space<vmem>>, vector<128x128xf32>
    %cst_12 = arith.constant dense<0.000000e+00> : vector<8x128xf32>
    %11 = tpu.matmul %9, %10, %cst_12 {dimension_numbers = #tpu.dot_dimension_numbers<[1], [0], [0], [1], [0, 0, 1, 1], [], []>} : vector<8x128xf32>, vector<128x128xf32>, vector<8x128xf32> -> vector<8x128xf32>
    %12 = vector.broadcast %1 : vector<1x128xf32> to vector<8x128xf32>
    %13 = arith.addf %11, %12 : vector<8x128xf32>
    %cst_13 = arith.constant 0.000000e+00 : f32
    %14 = vector.broadcast %cst_13 : f32 to vector<8x128xf32>
    %15 = arith.maximumf %13, %14 : vector<8x128xf32>
    %c0_14 = arith.constant 0 : index
    %c0_15 = arith.constant 0 : index
    %16 = vector.load %arg6[%c0_14, %c0_15] : memref<128x128xf32, #tpu.memory_space<vmem>>, vector<128x128xf32>
    %cst_16 = arith.constant dense<0.000000e+00> : vector<8x128xf32>
    %17 = tpu.matmul %15, %16, %cst_16 {dimension_numbers = #tpu.dot_dimension_numbers<[1], [0], [0], [1], [0, 0, 1, 1], [], []>} : vector<8x128xf32>, vector<128x128xf32>, vector<8x128xf32> -> vector<8x128xf32>
    %18 = vector.broadcast %2 : vector<1x128xf32> to vector<8x128xf32>
    %19 = arith.addf %17, %18 : vector<8x128xf32>
    %cst_17 = arith.constant dense<0xFF800000> : vector<8xf32>
    %20 = vector.multi_reduction <maximumf>, %19, %cst_17 [1] : vector<8x128xf32> to vector<8xf32>
    %21 = vector.shape_cast %20 : vector<8xf32> to vector<8x1xf32>
    %22 = vector.broadcast %21 : vector<8x1xf32> to vector<8x128xf32>
    %23 = arith.subf %19, %22 : vector<8x128xf32>
    %24 = math.exp %23 : vector<8x128xf32>
    %cst_18 = arith.constant dense<0.000000e+00> : vector<8xf32>
    %25 = vector.multi_reduction <add>, %24, %cst_18 [1] : vector<8x128xf32> to vector<8xf32>
    %26 = vector.shape_cast %25 : vector<8xf32> to vector<8x1xf32>
    %27 = tpu.reciprocal %26 {approx = true} : vector<8x1xf32> -> vector<8x1xf32>
    %28 = vector.broadcast %27 : vector<8x1xf32> to vector<8x128xf32>
    %29 = arith.mulf %24, %28 : vector<8x128xf32>
    %30 = vector.extract_strided_slice %29 {offsets = [0, 0], sizes = [8, 4], strides = [1, 1]} : vector<8x128xf32> to vector<8x4xf32>
    %c0_19 = arith.constant 0 : index
    %c0_20 = arith.constant 0 : index
    %31 = vector.load %arg8[%c0_19, %c0_20] : memref<8x4xf32, #tpu.memory_space<vmem>>, vector<8x4xf32>
    tpu.vector_store %arg8[%c0_19, %c0_20], %30 {strides = array<i32>} : memref<8x4xf32, #tpu.memory_space<vmem>>, vector<8x4xf32>,
    return
  }
  func.func @transform_0(%arg0: i32) -> (i32, i32) {
    %c0_i32 = arith.constant 0 : i32
    %c0_i32_0 = arith.constant 0 : i32
    return %arg0, %c0_i32 : i32, i32
  }
  func.func @transform_1(%arg0: i32) -> (i32, i32) {
    %c0_i32 = arith.constant 0 : i32
    %c0_i32_0 = arith.constant 0 : i32
    %c0_i32_1 = arith.constant 0 : i32
    return %c0_i32, %c0_i32_0 : i32, i32
  }
  func.func @transform_2(%arg0: i32) -> (i32, i32) {
    %c0_i32 = arith.constant 0 : i32
    %c0_i32_0 = arith.constant 0 : i32
    %c0_i32_1 = arith.constant 0 : i32
    return %c0_i32, %c0_i32_0 : i32, i32
  }
  func.func @transform_3(%arg0: i32) -> (i32, i32) {
    %c0_i32 = arith.constant 0 : i32
    %c0_i32_0 = arith.constant 0 : i32
    %c0_i32_1 = arith.constant 0 : i32
    return %c0_i32, %c0_i32_0 : i32, i32
  }
  func.func @transform_4(%arg0: i32) -> (i32, i32) {
    %c0_i32 = arith.constant 0 : i32
    %c0_i32_0 = arith.constant 0 : i32
    %c0_i32_1 = arith.constant 0 : i32
    return %c0_i32, %c0_i32_0 : i32, i32
  }
  func.func @transform_5(%arg0: i32) -> (i32, i32) {
    %c0_i32 = arith.constant 0 : i32
    %c0_i32_0 = arith.constant 0 : i32
    %c0_i32_1 = arith.constant 0 : i32
    return %c0_i32, %c0_i32_0 : i32, i32
  }
  func.func @transform_6(%arg0: i32) -> (i32, i32) {
    %c0_i32 = arith.constant 0 : i32
    %c0_i32_0 = arith.constant 0 : i32
    %c0_i32_1 = arith.constant 0 : i32
    return %c0_i32, %c0_i32_0 : i32, i32
  }
  func.func @transform_7(%arg0: i32) -> (i32, i32) {
    %c0_i32 = arith.constant 0 : i32
    %c0_i32_0 = arith.constant 0 : i32
    return %arg0, %c0_i32 : i32, i32
  }
}

</mosaic_0001>

<llo_original>
// kernel: tpu_custom_call.1
$region0: #{tpu_custom_call.1}
  #allocation0 [shape = 'u32[]', space=smem, size = 0x4, offset = 0x4, fixed_abs, tag = 'smem constant byte address 0x4 - core index']
  #allocation1 [shape = 'u32[72,128]{1,0:T(1,128)}', space=vmem, size = 0x9000, scoped, tag = 'internal scratch']
  %s0 = inlined_call_operand.hbm [shape: f32[8,32], index: 0, kind: input, shape index: {}]
  %s1 = inlined_call_operand.hbm [shape: f32[32,128], index: 1, kind: input, shape index: {}]
  %s2 = inlined_call_operand.vmem [shape: f32[1,128], index: 2, kind: input, shape index: {}]
  %s3 = inlined_call_operand.hbm [shape: f32[128,128], index: 3, kind: input, shape index: {}]
  %s4 = inlined_call_operand.vmem [shape: f32[1,128], index: 4, kind: input, shape index: {}]
  %s5 = inlined_call_operand.hbm [shape: f32[128,128], index: 5, kind: input, shape index: {}]
  %s6 = inlined_call_operand.vmem [shape: f32[1,128], index: 6, kind: input, shape index: {}]
  %s7 = inlined_call_operand.vmem [shape: f32[8,4], index: 7, kind: output, shape index: {}]
  %s8 = sld [smem:[#allocation0]]
  $region54: #{tpu_custom_call.1} parent=0
    _
  %s10 = ssub.s32 1, %s8
  %s11 = scalar_select 0, %s10, %s8
  $region1: #{tpu_custom_call.1} parent=0
    #allocation2 [shape = 'u8[4096]{0}', space=vmem, size = 0x1000, scoped, tag = 'input window, operand 0, single buffered']
    #allocation3 [shape = 's32[1]{0}', space=sflag, size = 0x4, scoped, tag = 'scoped memory for tpu_custom_call.1']
    #allocation4 [shape = 'u8[16384]{0}', space=vmem, size = 0x4000, scoped, tag = 'input window, operand 1, single buffered']
    #allocation5 [shape = 's32[1]{0}', space=sflag, size = 0x4, scoped, tag = 'scoped memory for tpu_custom_call.1']
    #allocation6 [shape = 'u8[65536]{0}', space=vmem, size = 0x10000, scoped, tag = 'input window, operand 3, single buffered']
    #allocation7 [shape = 'u8[65536]{0}', space=vmem, size = 0x10000, scoped, tag = 'input window, operand 5, single buffered']
    #allocation8 [shape = 's32[1]{0}', space=sflag, size = 0x4, scoped, tag = 'scoped memory for tpu_custom_call.1']
    %12 = vsyncpa [#allocation3], 0
    %13 = vsyncpa [#allocation5], 0
    %14 = vsyncpa [#allocation8], 0
    // Predicated region
    $region2: #{tpu_custom_call.1} parent=1 // pred_check
      _
    $region3: #{tpu_custom_call.1} parent=1 // pred_check_branch
      %16 = sbr.rel (0) target = $region5
    $region4: #{tpu_custom_call.1} parent=1 // pred_region
      %18 = vsyncadd [#allocation3], 0
      %s20 = sshll.u32 %s0, 4
      %s21 = int_to_ptr.hbm [resolvable:$true] %s20
      %s22 = sshll.u32 [#allocation2], 4
      %s23 = int_to_ptr.vmem [resolvable:$true] %s22
      %25 = dma.hbm_to_vmem [thread:$0]  %s21, 128, %s23, [#allocation3]
    $region5: #{tpu_custom_call.1} parent=1 // pred_fallthru
      _
    // Predicated region
    $region6: #{tpu_custom_call.1} parent=1 // pred_check
      _
    $region7: #{tpu_custom_call.1} parent=1 // pred_check_branch
      %27 = sbr.rel (0) target = $region9
    $region8: #{tpu_custom_call.1} parent=1 // pred_region
      %29 = vsyncadd [#allocation5], 0
      %s30 = sshll.u32 %s1, 4
      %s31 = int_to_ptr.hbm [resolvable:$true] %s30
      %s32 = sshll.u32 [#allocation4], 4
      %s33 = int_to_ptr.vmem [resolvable:$true] %s32
      %38 = dma.hbm_to_vmem [thread:$0]  %s31, 512, %s33, [#allocation5], 128, 128, 8
    $region9: #{tpu_custom_call.1} parent=1 // pred_fallthru
      _
    // Predicated region
    $region10: #{tpu_custom_call.1} parent=1 // pred_check
      _
    $region11: #{tpu_custom_call.1} parent=1 // pred_check_branch
      %40 = sbr.rel (0) target = $region13
    $region12: #{tpu_custom_call.1} parent=1 // pred_region
      _
    $region13: #{tpu_custom_call.1} parent=1 // pred_fallthru
      _
    // Predicated region
    $region14: #{tpu_custom_call.1} parent=1 // pred_check
      _
    $region15: #{tpu_custom_call.1} parent=1 // pred_check_branch
      %42 = sbr.rel (0) target = $region17
    $region16: #{tpu_custom_call.1} parent=1 // pred_region
      %44 = vsyncadd [#allocation5], 0
      %s45 = sshll.u32 %s3, 4
      %s46 = int_to_ptr.hbm [resolvable:$true] %s45
      %s47 = sshll.u32 [#allocation6], 4
      %s48 = int_to_ptr.vmem [resolvable:$true] %s47
      %53 = dma.hbm_to_vmem [thread:$0]  %s46, 2048, %s48, [#allocation5], 128, 128, 8
    $region17: #{tpu_custom_call.1} parent=1 // pred_fallthru
      _
    // Predicated region
    $region18: #{tpu_custom_call.1} parent=1 // pred_check
      _
    $region19: #{tpu_custom_call.1} parent=1 // pred_check_branch
      %55 = sbr.rel (0) target = $region21
    $region20: #{tpu_custom_call.1} parent=1 // pred_region
      _
    $region21: #{tpu_custom_call.1} parent=1 // pred_fallthru
      _
    // Predicated region
    $region22: #{tpu_custom_call.1} parent=1 // pred_check
      _
    $region23: #{tpu_custom_call.1} parent=1 // pred_check_branch
      %57 = sbr.rel (0) target = $region25
    $region24: #{tpu_custom_call.1} parent=1 // pred_region
      %59 = vsyncadd [#allocation8], 0
      %s60 = sshll.u32 %s5, 4
      %s61 = int_to_ptr.hbm [resolvable:$true] %s60
      %s62 = sshll.u32 [#allocation7], 4
      %s63 = int_to_ptr.vmem [resolvable:$true] %s62
      %68 = dma.hbm_to_vmem [thread:$0]  %s61, 2048, %s63, [#allocation8], 128, 128, 8
    $region25: #{tpu_custom_call.1} parent=1 // pred_fallthru
      _
    // Predicated region
    $region26: #{tpu_custom_call.1} parent=1 // pred_check
      _
    $region27: #{tpu_custom_call.1} parent=1 // pred_check_branch
      %70 = sbr.rel (0) target = $region29
    $region28: #{tpu_custom_call.1} parent=1 // pred_region
      _
    $region29: #{tpu_custom_call.1} parent=1 // pred_fallthru
      _
    // Predicated region
    $region30: #{tpu_custom_call.1} parent=1 // pred_check
      _
    $region31: #{tpu_custom_call.1} parent=1 // pred_check_branch
      %72 = sbr.rel (0) target = $region33
    $region32: #{tpu_custom_call.1} parent=1 // pred_region
      %74 = dma.done [#allocation3], 128
    $region33: #{tpu_custom_call.1} parent=1 // pred_fallthru
      _
    // Predicated region
    $region34: #{tpu_custom_call.1} parent=1 // pred_check
      _
    $region35: #{tpu_custom_call.1} parent=1 // pred_check_branch
      %76 = sbr.rel (0) target = $region37
    $region36: #{tpu_custom_call.1} parent=1 // pred_region
      %78 = dma.done [#allocation5], 512
    $region37: #{tpu_custom_call.1} parent=1 // pred_fallthru
      _
    // Predicated region
    $region38: #{tpu_custom_call.1} parent=1 // pred_check
      _
    $region39: #{tpu_custom_call.1} parent=1 // pred_check_branch
      %80 = sbr.rel (0) target = $region41
    $region40: #{tpu_custom_call.1} parent=1 // pred_region
      %82 = dma.done [#allocation5], 2048
    $region41: #{tpu_custom_call.1} parent=1 // pred_fallthru
      _
    // Predicated region
    $region42: #{tpu_custom_call.1} parent=1 // pred_check
      _
    $region43: #{tpu_custom_call.1} parent=1 // pred_check_branch
      %84 = sbr.rel (0) target = $region45
    $region44: #{tpu_custom_call.1} parent=1 // pred_region
      %86 = dma.done [#allocation8], 2048
    $region45: #{tpu_custom_call.1} parent=1 // pred_fallthru
      _
    %v87 = vld [vmem:[%s2] sm:$0x1]
    %v88 = vld [vmem:[%s4] sm:$0x1]
    %v89 = vld [vmem:[%s6] sm:$0x1]
    %v90 = vld [vmem:[#allocation2] sm:$0xff]
    %v91 = vld [vmem:[#allocation4] sm:$0xff]
    %v92 = vld [vmem:[#allocation4 + $0x8] sm:$0xff]
    %v93 = vld [vmem:[#allocation4 + $0x10] sm:$0xff]
    %v94 = vld [vmem:[#allocation4 + $0x18] sm:$0xff]
    %v96 = vperm.slane %v87, 0
    %vm98 = vcmask 261120
    %v100 = vsel %vm98, %v90, 0
    %102 = vmatpush.msra.mxu0 0.0
    %103 = vmatpush.msra.mxu0 0.0
    %104 = vmatpush.msra.mxu0 0.0
    %105 = vmatpush.msra.mxu0 0.0
    %106 = vmatpush.msra.mxu0 0.0
    %107 = vmatpush.msra.mxu0 0.0
    %108 = vmatpush.msra.mxu0 0.0
    %109 = vmatpush.msra.mxu0 0.0
    %110 = vmatpush.msra.mxu0 0.0
    %111 = vmatpush.msra.mxu0 0.0
    %112 = vmatpush.msra.mxu0 0.0
    %113 = vmatpush.msra.mxu0 0.0
    %114 = vmatpush.msra.mxu0 %v94
    %115 = vmatpush.msra.mxu0 %v93
    %116 = vmatpush.msra.mxu0 %v92
    %117 = vmatpush.msra.mxu0 %v91
    %118 = vmatmul.f32.gmra.mxu0 %v100
    %v119 = vpop.f32.mrf.mxu0
    %v120 = vadd.f32 %v96, %v119
    %121 = vdwg.mxu0
    %v122 = vmax.f32 %v120, 0.0
    %v123 = vld [vmem:[#allocation6] sm:$0xff]
    %v124 = vld [vmem:[#allocation6 + $0x8] sm:$0xff]
    %v125 = vld [vmem:[#allocation6 + $0x10] sm:$0xff]
    %v126 = vld [vmem:[#allocation6 + $0x18] sm:$0xff]
    %v127 = vld [vmem:[#allocation6 + $0x20] sm:$0xff]
    %v128 = vld [vmem:[#allocation6 + $0x28] sm:$0xff]
    %v129 = vld [vmem:[#allocation6 + $0x30] sm:$0xff]
    %v130 = vld [vmem:[#allocation6 + $0x38] sm:$0xff]
    %v131 = vld [vmem:[#allocation6 + $0x40] sm:$0xff]
    %v132 = vld [vmem:[#allocation6 + $0x48] sm:$0xff]
    %v133 = vld [vmem:[#allocation6 + $0x50] sm:$0xff]
    %v134 = vld [vmem:[#allocation6 + $0x58] sm:$0xff]
    %v135 = vld [vmem:[#allocation6 + $0x60] sm:$0xff]
    %v136 = vld [vmem:[#allocation6 + $0x68] sm:$0xff]
    %v137 = vld [vmem:[#allocation6 + $0x70] sm:$0xff]
    %v138 = vld [vmem:[#allocation6 + $0x78] sm:$0xff]
    %v140 = vperm.slane %v88, 0
    %142 = vmatpush.msra.mxu0 %v138
    %143 = vmatpush.msra.mxu0 %v137
    %144 = vmatpush.msra.mxu0 %v136
    %145 = vmatpush.msra.mxu0 %v135
    %146 = vmatpush.msra.mxu0 %v134
    %147 = vmatpush.msra.mxu0 %v133
    %148 = vmatpush.msra.mxu0 %v132
    %149 = vmatpush.msra.mxu0 %v131
    %150 = vmatpush.msra.mxu0 %v130
    %151 = vmatpush.msra.mxu0 %v129
    %152 = vmatpush.msra.mxu0 %v128
    %153 = vmatpush.msra.mxu0 %v127
    %154 = vmatpush.msra.mxu0 %v126
    %155 = vmatpush.msra.mxu0 %v125
    %156 = vmatpush.msra.mxu0 %v124
    %157 = vmatpush.msra.mxu0 %v123
    %158 = vmatmul.f32.gmra.mxu0 %v122
    %v159 = vpop.f32.mrf.mxu0
    %v160 = vadd.f32 %v140, %v159
    %161 = vdwg.mxu0
    %v162 = vmax.f32 %v160, 0.0
    %v163 = vld [vmem:[#allocation7] sm:$0xff]
    %v164 = vld [vmem:[#allocation7 + $0x8] sm:$0xff]
    %v165 = vld [vmem:[#allocation7 + $0x10] sm:$0xff]
    %v166 = vld [vmem:[#allocation7 + $0x18] sm:$0xff]
    %v167 = vld [vmem:[#allocation7 + $0x20] sm:$0xff]
    %v168 = vld [vmem:[#allocation7 + $0x28] sm:$0xff]
    %v169 = vld [vmem:[#allocation7 + $0x30] sm:$0xff]
    %v170 = vld [vmem:[#allocation7 + $0x38] sm:$0xff]
    %v171 = vld [vmem:[#allocation7 + $0x40] sm:$0xff]
    %v172 = vld [vmem:[#allocation7 + $0x48] sm:$0xff]
    %v173 = vld [vmem:[#allocation7 + $0x50] sm:$0xff]
    %v174 = vld [vmem:[#allocation7 + $0x58] sm:$0xff]
    %v175 = vld [vmem:[#allocation7 + $0x60] sm:$0xff]
    %v176 = vld [vmem:[#allocation7 + $0x68] sm:$0xff]
    %v177 = vld [vmem:[#allocation7 + $0x70] sm:$0xff]
    %v178 = vld [vmem:[#allocation7 + $0x78] sm:$0xff]
    %v180 = vperm.slane %v89, 0
    %182 = vmatpush.msra.mxu0 %v178
    %183 = vmatpush.msra.mxu0 %v177
    %184 = vmatpush.msra.mxu0 %v176
    %185 = vmatpush.msra.mxu0 %v175
    %186 = vmatpush.msra.mxu0 %v174
    %187 = vmatpush.msra.mxu0 %v173
    %188 = vmatpush.msra.mxu0 %v172
    %189 = vmatpush.msra.mxu0 %v171
    %190 = vmatpush.msra.mxu0 %v170
    %191 = vmatpush.msra.mxu0 %v169
    %192 = vmatpush.msra.mxu0 %v168
    %193 = vmatpush.msra.mxu0 %v167
    %194 = vmatpush.msra.mxu0 %v166
    %195 = vmatpush.msra.mxu0 %v165
    %196 = vmatpush.msra.mxu0 %v164
    %197 = vmatpush.msra.mxu0 %v163
    %198 = vmatmul.f32.gmra.mxu0 %v162
    %v199 = vpop.f32.mrf.mxu0
    %v200 = vadd.f32 %v180, %v199
    %201 = vdwg.mxu0
    %202 = vmax.xlane.f32.xlu0 %v200
    %v203 = vpop.xlane.xlu0 %202
    %v204 = vsub.f32 %v200, %v203
    %v205 = vmul.f32 %v204, 1.442695
    %v206 = vpow.pop %v205
    %207 = vadd.xlane.f32.xlu0 %v206
    %v208 = vpop.xlane.xlu0 %207
    %v209 = vrcp.pop %v208
    %v210 = vmul.f32 %v206, %v209
    %vm211 = vcmask 31744
    %212 = vst.msk [vmem:[%s7] sm:$0xff] %vm211, %v210
    // Predicated region
    $region46: #{tpu_custom_call.1} parent=1 // pred_check
      _
    $region47: #{tpu_custom_call.1} parent=1 // pred_check_branch
      %214 = sbr.rel (0) target = $region49
    $region48: #{tpu_custom_call.1} parent=1 // pred_region
      _
    $region49: #{tpu_custom_call.1} parent=1 // pred_fallthru
      _
    // Predicated region
    $region50: #{tpu_custom_call.1} parent=1 // pred_check
      _
    $region51: #{tpu_custom_call.1} parent=1 // pred_check_branch
      %216 = sbr.rel (0) target = $region53
    $region52: #{tpu_custom_call.1} parent=1 // pred_region
      _
    $region53: #{tpu_custom_call.1} parent=1 // pred_fallthru
      _
    %217 = vsyncpa [#allocation3], 1
    %218 = vsyncpa [#allocation5], 1
    %219 = vsyncpa [#allocation8], 1

</llo_original>
